<compile_context>
chip_gen: v5e
topology: v5e:2x2
jax: 0.10.0
libtpu: 0.0.40
codegen_flags: <defaults>
</compile_context>

<pallas_src>
import functools

import jax
import jax.numpy as jnp
from jax import lax
from jax.experimental import pallas as pl
from jax.experimental.pallas import tpu as pltpu

NEG_SLOPE = 0.01            # nn.LeakyReLU() default
OUT_DIMS = (3, 1, 3)        # lins, lins1, lins2 final widths (hardcoded)
N_BRANCH = 3
OUT_TOTAL = sum(OUT_DIMS)   # 7
OUT_PAD = 8                 # merged output slab padded to 8 sublanes


def _round_up(n, m):
    return ((n + m - 1) // m) * m


def _linkpredictor_kernel(x_ref, w0_ref, b0_ref, wm_ref, bm_ref,
                          wlt_ref, blt_ref, o_ref, *, n_mid):
    """One row tile through the branch-fused MLP.

    x_ref  : (tm, in_dim)   input rows
    w0_ref : (in_dim, 3H) bf16      b0_ref : (1, 3H) f32
    wm_ref : (n_mid, 3H, 3H) bf16   bm_ref : (n_mid, 1, 3H) f32
    wlt_ref: (8, 3H) bf16           blt_ref: (8, 1) f32
    o_ref  : (8, tm) f32   (lane-dense merged output, transposed)
    """
    cdt = w0_ref.dtype   # MXU compute dtype (bf16), f32 accumulation

    # first layer of all three branches at once
    h = jnp.dot(x_ref[...].astype(cdt), w0_ref[...],
                preferred_element_type=jnp.float32)
    h = h + b0_ref[...]
    h = h * jnp.where(h > 0, 2.0, 1.0 + NEG_SLOPE)      # y + LeakyReLU(y)

    # middle layers (block-diagonal merged weights), statically unrolled
    # (n_mid is small here; switch to fori_loop for deep stacks)
    for layer in range(n_mid):
        h = jnp.dot(h.astype(cdt), wm_ref[layer],
                    preferred_element_type=jnp.float32)
        h = h + bm_ref[layer]
        h = h * jnp.where(h > 0, 2.0, 1.0 + NEG_SLOPE)

    # final layer, computed transposed so the output slab is lane-dense (8, tm)
    y = lax.dot_general(wlt_ref[...], h.astype(cdt),
                        dimension_numbers=(((1,), (1,)), ((), ())),
                        preferred_element_type=jnp.float32)
    y = y + blt_ref[...]
    o_ref[...] = y.astype(o_ref.dtype)


@functools.partial(jax.jit, static_argnames=("tm",))
def link_predictor_forward(params, x, *, tm=1024):
    """x: [..., in_dim] -> (out0 [...,3], out1 [...,1], out2 [...,3])."""
    *lead, in_dim = x.shape
    n_rows = 1
    for d in lead:
        n_rows *= d
    xf = x.reshape(n_rows, in_dim)          # no padding pass over x

    w0, b0 = params["w0"], params["b0"]
    wm, bm = params["wm"], params["bm"]
    wlt, blt = params["wl_t"], params["bl_t"]
    n_mid = wm.shape[0]
    hidden3 = w0.shape[1]

    # Row tile: large, but capped so the grid has >= 2 steps (v7x megacore),
    # and a multiple of 128 so the transposed output stores are full-lane.
    tm_eff = min(tm, _round_up(max(pl.cdiv(n_rows, 2), 1), 128))
    grid = pl.cdiv(n_rows, tm_eff)

    # Explicit VMEM budget: double-buffered x + output, weights (2 bufs each),
    # a few live f32 copies of h.  Clamped to [16 MiB, 64 MiB] (v7x physical).
    need = (2 * tm_eff * in_dim * xf.dtype.itemsize
            + 2 * OUT_PAD * tm_eff * 4
            + 2 * (w0.size + wm.size + wlt.size) * 2
            + 2 * (b0.size + bm.size + blt.size) * 4
            + 6 * tm_eff * hidden3 * 4)
    vmem_limit = int(min(64 * 2**20, max(16 * 2**20, 2 * need)))

    kernel = functools.partial(_linkpredictor_kernel, n_mid=n_mid)
    const2 = lambda i: (0, 0)
    const3 = lambda i: (0, 0, 0)
    out_t = pl.pallas_call(
        kernel,
        out_shape=jax.ShapeDtypeStruct((OUT_PAD, n_rows), jnp.float32),
        grid_spec=pltpu.PrefetchScalarGridSpec(
            num_scalar_prefetch=0,
            grid=(grid,),
            in_specs=[
                pl.BlockSpec((tm_eff, in_dim), lambda i: (i, 0)),
                # grid-invariant weight/bias blocks (constant index_map):
                pl.BlockSpec(w0.shape, const2),
                pl.BlockSpec(b0.shape, const2),
                pl.BlockSpec(wm.shape, const3),
                pl.BlockSpec(bm.shape, const3),
                pl.BlockSpec(wlt.shape, const2),
                pl.BlockSpec(blt.shape, const2),
            ],
            out_specs=pl.BlockSpec((OUT_PAD, tm_eff), lambda i: (0, i)),
        ),
        compiler_params=pltpu.CompilerParams(
            dimension_semantics=("parallel",),
            vmem_limit_bytes=vmem_limit),
    )(xf, w0, b0, wm, bm, wlt, blt)

    out = out_t.T                                    # (n_rows, 8) in the wrapper
    o0 = out[:, 0:3].reshape(*lead, 3)
    o1 = out[:, 3:4].reshape(*lead, 1)
    o2 = out[:, 4:7].reshape(*lead, 3)
    return o0, o1, o2


def init_params(key, in_dim, hidden_dim, num_layers, *,
                compute_dtype=jnp.bfloat16):
    """PyTorch-Linear-style init.  Returns (merged_params, raw_params)."""
    assert num_layers >= 3, "this implementation expects num_layers >= 3"
    n_mid = num_layers - 2
    H = hidden_dim

    def linear(k, fan_in, fan_out):
        kw, kb = jax.random.split(k)
        bound = 1.0 / (fan_in ** 0.5)
        w = jax.random.uniform(kw, (fan_in, fan_out), jnp.float32, -bound, bound)
        b = jax.random.uniform(kb, (fan_out,), jnp.float32, -bound, bound)
        return w, b

    raw = []
    for out_dim in OUT_DIMS:
        key, k = jax.random.split(key)
        layers = [linear(k, in_dim, H)]
        for _ in range(n_mid):
            key, k = jax.random.split(key)
            layers.append(linear(k, H, H))
        key, k = jax.random.split(key)
        layers.append(linear(k, H, out_dim))
        raw.append(layers)

    # merged first layer: (in_dim, 3H)
    w0 = jnp.concatenate([raw[br][0][0] for br in range(N_BRANCH)], axis=1)
    b0 = jnp.concatenate([raw[br][0][1] for br in range(N_BRANCH)])[None, :]

    # block-diagonal middle layers: (n_mid, 3H, 3H)
    wm_layers, bm_layers = [], []
    for l in range(n_mid):
        blk = jnp.zeros((N_BRANCH * H, N_BRANCH * H), jnp.float32)
        for br in range(N_BRANCH):
            blk = blk.at[br * H:(br + 1) * H, br * H:(br + 1) * H].set(
                raw[br][1 + l][0])
        wm_layers.append(blk)
        bm_layers.append(
            jnp.concatenate([raw[br][1 + l][1] for br in range(N_BRANCH)])[None, :])
    wm = jnp.stack(wm_layers)
    bm = jnp.stack(bm_layers)

    # merged final layer, transposed: (8, 3H); row 7 is zero padding
    wl_t = jnp.zeros((OUT_PAD, N_BRANCH * H), jnp.float32)
    bl_t = jnp.zeros((OUT_PAD, 1), jnp.float32)
    row = 0
    for br, out_dim in enumerate(OUT_DIMS):
        w_last, b_last = raw[br][-1]
        wl_t = wl_t.at[row:row + out_dim, br * H:(br + 1) * H].set(w_last.T)
        bl_t = bl_t.at[row:row + out_dim, 0].set(b_last)
        row += out_dim

    merged = {
        "w0": w0.astype(compute_dtype), "b0": b0,
        "wm": wm.astype(compute_dtype), "bm": bm,
        "wl_t": wl_t.astype(compute_dtype), "bl_t": bl_t,
    }
    return merged, raw


def _reference(raw_params, x, matmul_dtype=jnp.float32):
    """Pure-JAX reference of the PyTorch forward (eval mode), per branch."""
    lead = x.shape[:-1]
    xf = x.reshape(-1, x.shape[-1]).astype(jnp.float32)
    outs = []
    for br, out_dim in enumerate(OUT_DIMS):
        layers = raw_params[br]
        h = xf
        for w, b in layers[:-1]:
            y = jnp.dot(h.astype(matmul_dtype), w.astype(matmul_dtype),
                        preferred_element_type=jnp.float32) + b
            h = y + jnp.where(y > 0, y, NEG_SLOPE * y)
        w, b = layers[-1]
        y = jnp.dot(h.astype(matmul_dtype), w.astype(matmul_dtype),
                    preferred_element_type=jnp.float32) + b
        outs.append(y.reshape(*lead, out_dim))
    return tuple(outs)


if __name__ == "__main__":
    IN_DIM, HIDDEN_DIM, NUM_LAYERS = 32, 32, 3
    N_ROWS = 200   # not a multiple of the row tile: exercises ragged last tile

    merged, raw = init_params(jax.random.PRNGKey(0), IN_DIM, HIDDEN_DIM,
                              NUM_LAYERS)
    x = jax.random.normal(jax.random.PRNGKey(0), (N_ROWS, IN_DIM), jnp.float32)

    out = link_predictor_forward(merged, x)
    out = jax.block_until_ready(out)
    o_main, o_aux1, o_aux2 = out

    assert o_main.shape == (N_ROWS, 3)
    assert o_aux1.shape == (N_ROWS, 1)
    assert o_aux2.shape == (N_ROWS, 3)

    # tight check vs a reference that mirrors the kernel's bf16 MXU / f32 accum
    ref_bf16 = _reference(raw, x, matmul_dtype=jnp.bfloat16)
    # loose check vs the exact f32 PyTorch math
    ref_f32 = _reference(raw, x, matmul_dtype=jnp.float32)
    for o, rb, rf in zip(out, ref_bf16, ref_f32):
        assert jnp.allclose(o, rb, atol=1e-3, rtol=1e-3)
        assert jnp.allclose(o, rf, atol=5e-2, rtol=5e-2)

    print("KERNEL_OK")
</pallas_src>

<mosaic_0001>
module attributes {stable_mosaic.version = 11 : i64} {
  func.func @_linkpredictor_kernel(%arg0: i32, %arg1: memref<128x32xf32, #tpu.memory_space<vmem>>, %arg2: memref<32x96xbf16, #tpu.memory_space<vmem>>, %arg3: memref<1x96xf32, #tpu.memory_space<vmem>>, %arg4: memref<1x96x96xbf16, #tpu.memory_space<vmem>>, %arg5: memref<1x1x96xf32, #tpu.memory_space<vmem>>, %arg6: memref<8x96xbf16, #tpu.memory_space<vmem>>, %arg7: memref<8x1xf32, #tpu.memory_space<vmem>>, %arg8: memref<8x128xf32, #tpu.memory_space<vmem>>) attributes {dimension_semantics = [#tpu.dimension_semantics<parallel>], iteration_bounds = array<i64: 2>, scalar_prefetch = 0 : i64, scratch_operands = 0 : i64, tpu.core_type = #tpu.core_type<tc>, window_params = [{transform_indices = @transform_0, window_bounds = array<i64: 128, 32>}, {pipeline_mode = #tpu.pipeline_mode<synchronous>, transform_indices = @transform_1, window_bounds = array<i64: 32, 96>}, {pipeline_mode = #tpu.pipeline_mode<synchronous>, transform_indices = @transform_2, window_bounds = array<i64: 1, 96>}, {pipeline_mode = #tpu.pipeline_mode<synchronous>, transform_indices = @transform_3, window_bounds = array<i64: 1, 96, 96>}, {pipeline_mode = #tpu.pipeline_mode<synchronous>, transform_indices = @transform_4, window_bounds = array<i64: 1, 1, 96>}, {pipeline_mode = #tpu.pipeline_mode<synchronous>, transform_indices = @transform_5, window_bounds = array<i64: 8, 96>}, {pipeline_mode = #tpu.pipeline_mode<synchronous>, transform_indices = @transform_6, window_bounds = array<i64: 8, 1>}, {transform_indices = @transform_7, window_bounds = array<i64: 8, 128>}]} {
    %c0 = arith.constant 0 : index
    %c0_0 = arith.constant 0 : index
    %0 = vector.load %arg1[%c0, %c0_0] : memref<128x32xf32, #tpu.memory_space<vmem>>, vector<128x32xf32>
    %1 = arith.truncf %0 : vector<128x32xf32> to vector<128x32xbf16>
    %c0_1 = arith.constant 0 : index
    %c0_2 = arith.constant 0 : index
    %2 = vector.load %arg2[%c0_1, %c0_2] : memref<32x96xbf16, #tpu.memory_space<vmem>>, vector<32x96xbf16>
    %cst = arith.constant dense<0.000000e+00> : vector<128x96xf32>
    %3 = tpu.matmul %1, %2, %cst {dimension_numbers = #tpu.dot_dimension_numbers<[1], [0], [0], [1], [0, 0, 1, 1], [], []>} : vector<128x32xbf16>, vector<32x96xbf16>, vector<128x96xf32> -> vector<128x96xf32>
    %c0_3 = arith.constant 0 : index
    %c0_4 = arith.constant 0 : index
    %4 = vector.load %arg3[%c0_3, %c0_4] : memref<1x96xf32, #tpu.memory_space<vmem>>, vector<1x96xf32>
    %5 = vector.broadcast %4 : vector<1x96xf32> to vector<128x96xf32>
    %6 = arith.addf %3, %5 : vector<128x96xf32>
    %cst_5 = arith.constant 0.000000e+00 : f32
    %7 = vector.broadcast %cst_5 : f32 to vector<128x96xf32>
    %8 = arith.cmpf ogt, %6, %7 : vector<128x96xf32>
    %cst_6 = arith.constant 2.000000e+00 : f32
    %cst_7 = arith.constant 1.010000e+00 : f32
    %9 = vector.broadcast %cst_6 : f32 to vector<128x96xf32>
    %10 = vector.broadcast %cst_7 : f32 to vector<128x96xf32>
    %11 = arith.select %8, %9, %10 : vector<128x96xi1>, vector<128x96xf32>
    %12 = arith.mulf %6, %11 : vector<128x96xf32>
    %13 = arith.truncf %12 : vector<128x96xf32> to vector<128x96xbf16>
    %c0_8 = arith.constant 0 : index
    %c0_9 = arith.constant 0 : index
    %c0_10 = arith.constant 0 : index
    %14 = vector.load %arg4[%c0_8, %c0_9, %c0_10] : memref<1x96x96xbf16, #tpu.memory_space<vmem>>, vector<1x96x96xbf16>
    %15 = vector.shape_cast %14 : vector<1x96x96xbf16> to vector<96x96xbf16>
    %cst_11 = arith.constant dense<0.000000e+00> : vector<128x96xf32>
    %16 = tpu.matmul %13, %15, %cst_11 {dimension_numbers = #tpu.dot_dimension_numbers<[1], [0], [0], [1], [0, 0, 1, 1], [], []>} : vector<128x96xbf16>, vector<96x96xbf16>, vector<128x96xf32> -> vector<128x96xf32>
    %c0_12 = arith.constant 0 : index
    %c0_13 = arith.constant 0 : index
    %c0_14 = arith.constant 0 : index
    %17 = vector.load %arg5[%c0_12, %c0_13, %c0_14] : memref<1x1x96xf32, #tpu.memory_space<vmem>>, vector<1x1x96xf32>
    %18 = vector.shape_cast %17 : vector<1x1x96xf32> to vector<1x96xf32>
    %19 = vector.broadcast %18 : vector<1x96xf32> to vector<128x96xf32>
    %20 = arith.addf %16, %19 : vector<128x96xf32>
    %cst_15 = arith.constant 0.000000e+00 : f32
    %21 = vector.broadcast %cst_15 : f32 to vector<128x96xf32>
    %22 = arith.cmpf ogt, %20, %21 : vector<128x96xf32>
    %cst_16 = arith.constant 2.000000e+00 : f32
    %cst_17 = arith.constant 1.010000e+00 : f32
    %23 = vector.broadcast %cst_16 : f32 to vector<128x96xf32>
    %24 = vector.broadcast %cst_17 : f32 to vector<128x96xf32>
    %25 = arith.select %22, %23, %24 : vector<128x96xi1>, vector<128x96xf32>
    %26 = arith.mulf %20, %25 : vector<128x96xf32>
    %c0_18 = arith.constant 0 : index
    %c0_19 = arith.constant 0 : index
    %27 = vector.load %arg6[%c0_18, %c0_19] : memref<8x96xbf16, #tpu.memory_space<vmem>>, vector<8x96xbf16>
    %28 = arith.truncf %26 : vector<128x96xf32> to vector<128x96xbf16>
    %cst_20 = arith.constant dense<0.000000e+00> : vector<8x128xf32>
    %29 = tpu.matmul %27, %28, %cst_20 {dimension_numbers = #tpu.dot_dimension_numbers<[1], [1], [0], [0], [0, 0, 1, 0], [], []>} : vector<8x96xbf16>, vector<128x96xbf16>, vector<8x128xf32> -> vector<8x128xf32>
    %c0_21 = arith.constant 0 : index
    %c0_22 = arith.constant 0 : index
    %30 = vector.load %arg7[%c0_21, %c0_22] : memref<8x1xf32, #tpu.memory_space<vmem>>, vector<8x1xf32>
    %31 = vector.broadcast %30 : vector<8x1xf32> to vector<8x128xf32>
    %32 = arith.addf %29, %31 : vector<8x128xf32>
    %c0_23 = arith.constant 0 : index
    %c0_24 = arith.constant 0 : index
    %33 = vector.load %arg8[%c0_23, %c0_24] : memref<8x128xf32, #tpu.memory_space<vmem>>, vector<8x128xf32>
    tpu.vector_store %arg8[%c0_23, %c0_24], %32 {strides = array<i32>} : memref<8x128xf32, #tpu.memory_space<vmem>>, vector<8x128xf32>,
    return
  }
  func.func @transform_0(%arg0: i32) -> (i32, i32) {
    %c0_i32 = arith.constant 0 : i32
    %c0_i32_0 = arith.constant 0 : i32
    return %arg0, %c0_i32 : i32, i32
  }
  func.func @transform_1(%arg0: i32) -> (i32, i32) {
    %c0_i32 = arith.constant 0 : i32
    %c0_i32_0 = arith.constant 0 : i32
    %c0_i32_1 = arith.constant 0 : i32
    return %c0_i32, %c0_i32_0 : i32, i32
  }
  func.func @transform_2(%arg0: i32) -> (i32, i32) {
    %c0_i32 = arith.constant 0 : i32
    %c0_i32_0 = arith.constant 0 : i32
    %c0_i32_1 = arith.constant 0 : i32
    return %c0_i32, %c0_i32_0 : i32, i32
  }
  func.func @transform_3(%arg0: i32) -> (i32, i32, i32) {
    %c0_i32 = arith.constant 0 : i32
    %c0_i32_0 = arith.constant 0 : i32
    %c0_i32_1 = arith.constant 0 : i32
    %c0_i32_2 = arith.constant 0 : i32
    return %c0_i32, %c0_i32_0, %c0_i32_1 : i32, i32, i32
  }
  func.func @transform_4(%arg0: i32) -> (i32, i32, i32) {
    %c0_i32 = arith.constant 0 : i32
    %c0_i32_0 = arith.constant 0 : i32
    %c0_i32_1 = arith.constant 0 : i32
    %c0_i32_2 = arith.constant 0 : i32
    return %c0_i32, %c0_i32_0, %c0_i32_1 : i32, i32, i32
  }
  func.func @transform_5(%arg0: i32) -> (i32, i32) {
    %c0_i32 = arith.constant 0 : i32
    %c0_i32_0 = arith.constant 0 : i32
    %c0_i32_1 = arith.constant 0 : i32
    return %c0_i32, %c0_i32_0 : i32, i32
  }
  func.func @transform_6(%arg0: i32) -> (i32, i32) {
    %c0_i32 = arith.constant 0 : i32
    %c0_i32_0 = arith.constant 0 : i32
    %c0_i32_1 = arith.constant 0 : i32
    return %c0_i32, %c0_i32_0 : i32, i32
  }
  func.func @transform_7(%arg0: i32) -> (i32, i32) {
    %c0_i32 = arith.constant 0 : i32
    %c0_i32_0 = arith.constant 0 : i32
    return %c0_i32, %arg0 : i32, i32
  }
}

</mosaic_0001>

<llo_original>
// kernel: link_predictor_forward.1
$region0: #{link_predictor_forward.1}
  #allocation0 [shape = 'u32[]', space=smem, size = 0x4, offset = 0x4, fixed_abs, tag = 'smem constant byte address 0x4 - core index']
  #allocation1 [shape = 'u32[72,128]{1,0:T(1,128)}', space=vmem, size = 0x9000, scoped, tag = 'internal scratch']
  %s0 = inlined_call_operand.vmem [shape: f32[200,32], index: 0, kind: input, shape index: {}]
  %s1 = inlined_call_operand.vmem [shape: bf16[32,96], index: 1, kind: input, shape index: {}]
  %s2 = inlined_call_operand.vmem [shape: f32[1,96], index: 2, kind: input, shape index: {}]
  %s3 = inlined_call_operand.vmem [shape: bf16[1,96,96], index: 3, kind: input, shape index: {}]
  %s4 = inlined_call_operand.vmem [shape: f32[1,1,96], index: 4, kind: input, shape index: {}]
  %s5 = inlined_call_operand.vmem [shape: bf16[8,96], index: 5, kind: input, shape index: {}]
  %s6 = inlined_call_operand.vmem [shape: f32[8,1], index: 6, kind: input, shape index: {}]
  %s7 = inlined_call_operand.vmem [shape: f32[8,200], index: 7, kind: output, shape index: {}]
  %s8 = sld [smem:[#allocation0]]
  $region61: #{link_predictor_forward.1} parent=0
    _
  %s10 = ssub.s32 1, %s8
  %s11 = scalar_select 0, %s10, %s8
  loop: start=0, step=1, limit=4
  $region2: #{link_predictor_forward.1} parent=0 // loop_pre_header
    _
  $region3: #{link_predictor_forward.1} parent=0 // loop_header
    %s13 = sphi 0, %s17
    %p14 = scmp.ge.s32.totalorder %s13, 4
    %s23 = sphi 0, %s25
    %s26 = sphi 0, %s23
    %s27 = sphi 0, %s26
    %s43 = sphi 0, %s27
    %s47 = sphi 0, %s47
    %s49 = sphi 0, %s47
    %s50 = sphi 0, %s49
    %s64 = sphi 0, %s50
    %s68 = sphi 0, %s68
    %s70 = sphi 0, %s68
    %s71 = sphi 0, %s70
    %s85 = sphi 0, %s71
    %s89 = sphi 0, %s89
    %s91 = sphi 0, %s89
    %s92 = sphi 0, %s91
    %s106 = sphi 0, %s92
    %s110 = sphi 0, %s110
    %s112 = sphi 0, %s110
    %s113 = sphi 0, %s112
    %s127 = sphi 0, %s113
    %s131 = sphi 0, %s131
    %s133 = sphi 0, %s131
    %s134 = sphi 0, %s133
    %s148 = sphi 0, %s134
    %s152 = sphi 0, %s152
    %s154 = sphi 0, %s152
    %s155 = sphi 0, %s154
    %s169 = sphi 0, %s155
    %s175 = sphi 0, %s177
    %s178 = sphi 0, %s175
    %s179 = sphi 0, %s178
    %s195 = sphi 0, %s179
  $region4: #{link_predictor_forward.1} parent=0 // loop_header_branch
    %16 = sbr.rel (%p14) target = $region8
  $region5: #{link_predictor_forward.1} parent=0 // loop_body
    %s18 = ssub.s32 %s13, 1
    %s19 = ssub.s32 %s13, 2
    %s20 = sadd.s32 %s13, 1
    %s21 = ssub.s32 %s13, %s20
    %p22 = scmp.eq.s32.totalorder %s21, 0
    %s24 = sadd.s32 %s23, 1
    %s25 = scalar_select %p22, %s23, %s24
    %p28 = pneg %p22
    %p29 = scmp.eq.s32.totalorder %s13, 1
    %p30 = por %p28, %p29
    %p31 = scmp.ne.s32.totalorder %s23, %s26
    %p32 = scmp.eq.s32.totalorder %s13, 0
    %p33 = por %p31, %p32
    %p34 = scmp.ne.s32.totalorder %s23, %s26
    %p35 = scmp.eq.s32.totalorder %s18, 1
    %p36 = por %p34, %p35
    %p37 = scmp.ne.s32.totalorder %s26, %s27
    %p38 = scmp.eq.s32.totalorder %s18, 0
    %p39 = por %p37, %p38
    %p40 = scmp.ne.s32.totalorder %s26, %s27
    %p41 = scmp.eq.s32.totalorder %s19, 1
    %p42 = por %p40, %p41
    %p44 = scmp.ne.s32.totalorder %s27, %s43
    %p45 = scmp.eq.s32.totalorder %s19, 0
    %p46 = por %p44, %p45
    %s48 = sadd.s32 %s47, 1
    %p51 = scmp.eq.s32.totalorder %s13, 1
    %p52 = scmp.ne.s32.totalorder %s47, %s49
    %p53 = scmp.eq.s32.totalorder %s13, 0
    %p54 = por %p52, %p53
    %p55 = scmp.ne.s32.totalorder %s47, %s49
    %p56 = scmp.eq.s32.totalorder %s18, 1
    %p57 = por %p55, %p56
    %p58 = scmp.ne.s32.totalorder %s49, %s50
    %p59 = scmp.eq.s32.totalorder %s18, 0
    %p60 = por %p58, %p59
    %p61 = scmp.ne.s32.totalorder %s49, %s50
    %p62 = scmp.eq.s32.totalorder %s19, 1
    %p63 = por %p61, %p62
    %p65 = scmp.ne.s32.totalorder %s50, %s64
    %p66 = scmp.eq.s32.totalorder %s19, 0
    %p67 = por %p65, %p66
    %s69 = sadd.s32 %s68, 1
    %p72 = scmp.eq.s32.totalorder %s13, 1
    %p73 = scmp.ne.s32.totalorder %s68, %s70
    %p74 = scmp.eq.s32.totalorder %s13, 0
    %p75 = por %p73, %p74
    %p76 = scmp.ne.s32.totalorder %s68, %s70
    %p77 = scmp.eq.s32.totalorder %s18, 1
    %p78 = por %p76, %p77
    %p79 = scmp.ne.s32.totalorder %s70, %s71
    %p80 = scmp.eq.s32.totalorder %s18, 0
    %p81 = por %p79, %p80
    %p82 = scmp.ne.s32.totalorder %s70, %s71
    %p83 = scmp.eq.s32.totalorder %s19, 1
    %p84 = por %p82, %p83
    %p86 = scmp.ne.s32.totalorder %s71, %s85
    %p87 = scmp.eq.s32.totalorder %s19, 0
    %p88 = por %p86, %p87
    %s90 = sadd.s32 %s89, 1
    %p93 = scmp.eq.s32.totalorder %s13, 1
    %p94 = scmp.ne.s32.totalorder %s89, %s91
    %p95 = scmp.eq.s32.totalorder %s13, 0
    %p96 = por %p94, %p95
    %p97 = scmp.ne.s32.totalorder %s89, %s91
    %p98 = scmp.eq.s32.totalorder %s18, 1
    %p99 = por %p97, %p98
    %p100 = scmp.ne.s32.totalorder %s91, %s92
    %p101 = scmp.eq.s32.totalorder %s18, 0
    %p102 = por %p100, %p101
    %p103 = scmp.ne.s32.totalorder %s91, %s92
    %p104 = scmp.eq.s32.totalorder %s19, 1
    %p105 = por %p103, %p104
    %p107 = scmp.ne.s32.totalorder %s92, %s106
    %p108 = scmp.eq.s32.totalorder %s19, 0
    %p109 = por %p107, %p108
    %s111 = sadd.s32 %s110, 1
    %p114 = scmp.eq.s32.totalorder %s13, 1
    %p115 = scmp.ne.s32.totalorder %s110, %s112
    %p116 = scmp.eq.s32.totalorder %s13, 0
    %p117 = por %p115, %p116
    %p118 = scmp.ne.s32.totalorder %s110, %s112
    %p119 = scmp.eq.s32.totalorder %s18, 1
    %p120 = por %p118, %p119
    %p121 = scmp.ne.s32.totalorder %s112, %s113
    %p122 = scmp.eq.s32.totalorder %s18, 0
    %p123 = por %p121, %p122
    %p124 = scmp.ne.s32.totalorder %s112, %s113
    %p125 = scmp.eq.s32.totalorder %s19, 1
    %p126 = por %p124, %p125
    %p128 = scmp.ne.s32.totalorder %s113, %s127
    %p129 = scmp.eq.s32.totalorder %s19, 0
    %p130 = por %p128, %p129
    %s132 = sadd.s32 %s131, 1
    %p135 = scmp.eq.s32.totalorder %s13, 1
    %p136 = scmp.ne.s32.totalorder %s131, %s133
    %p137 = scmp.eq.s32.totalorder %s13, 0
    %p138 = por %p136, %p137
    %p139 = scmp.ne.s32.totalorder %s131, %s133
    %p140 = scmp.eq.s32.totalorder %s18, 1
    %p141 = por %p139, %p140
    %p142 = scmp.ne.s32.totalorder %s133, %s134
    %p143 = scmp.eq.s32.totalorder %s18, 0
    %p144 = por %p142, %p143
    %p145 = scmp.ne.s32.totalorder %s133, %s134
    %p146 = scmp.eq.s32.totalorder %s19, 1
    %p147 = por %p145, %p146
    %p149 = scmp.ne.s32.totalorder %s134, %s148
    %p150 = scmp.eq.s32.totalorder %s19, 0
    %p151 = por %p149, %p150
    %s153 = sadd.s32 %s152, 1
    %p156 = scmp.eq.s32.totalorder %s13, 1
    %p157 = scmp.ne.s32.totalorder %s152, %s154
    %p158 = scmp.eq.s32.totalorder %s13, 0
    %p159 = por %p157, %p158
    %p160 = scmp.ne.s32.totalorder %s152, %s154
    %p161 = scmp.eq.s32.totalorder %s18, 1
    %p162 = por %p160, %p161
    %p163 = scmp.ne.s32.totalorder %s154, %s155
    %p164 = scmp.eq.s32.totalorder %s18, 0
    %p165 = por %p163, %p164
    %p166 = scmp.ne.s32.totalorder %s154, %s155
    %p167 = scmp.eq.s32.totalorder %s19, 1
    %p168 = por %p166, %p167
    %p170 = scmp.ne.s32.totalorder %s155, %s169
    %p171 = scmp.eq.s32.totalorder %s19, 0
    %p172 = por %p170, %p171
    %s173 = ssub.s32 %s13, %s20
    %p174 = scmp.eq.s32.totalorder %s173, 0
    %s176 = sadd.s32 %s175, 1
    %s177 = scalar_select %p174, %s175, %s176
    %p180 = pneg %p174
    %p181 = scmp.eq.s32.totalorder %s13, 1
    %p182 = por %p180, %p181
    %p183 = scmp.ne.s32.totalorder %s175, %s178
    %p184 = scmp.eq.s32.totalorder %s13, 0
    %p185 = por %p183, %p184
    %p186 = scmp.ne.s32.totalorder %s175, %s178
    %p187 = scmp.eq.s32.totalorder %s18, 1
    %p188 = por %p186, %p187
    %p189 = scmp.ne.s32.totalorder %s178, %s179
    %p190 = scmp.eq.s32.totalorder %s18, 0
    %p191 = por %p189, %p190
    %p192 = scmp.ne.s32.totalorder %s178, %s179
    %p193 = scmp.eq.s32.totalorder %s19, 1
    %p194 = por %p192, %p193
    %p196 = scmp.ne.s32.totalorder %s179, %s195
    %p197 = scmp.eq.s32.totalorder %s19, 0
    %p198 = por %p196, %p197
    %p199 = scmp.le.s32.totalorder 1, %s13
    %p200 = scmp.lt.s32.totalorder %s13, 3
    %p201 = pnand %p199, %p200
    %p202 = pneg %p201
    // Predicated region
    $region9: #{link_predictor_forward.1} parent=5 // pred_check
      _
    $region10: #{link_predictor_forward.1} parent=5 // pred_check_branch
      %204 = sbr.rel (%p201) target = $region12
    $region11: #{link_predictor_forward.1} parent=5 // pred_region
      %s205 = ssub.s32 %s13, 1
      // Predicated region
      $region13: #{link_predictor_forward.1} parent=11 // pred_check
        %p206 = pneg %p60
      $region14: #{link_predictor_forward.1} parent=11 // pred_check_branch
        %208 = sbr.rel (%p206) target = $region16
      $region15: #{link_predictor_forward.1} parent=11 // pred_region
        _
      $region16: #{link_predictor_forward.1} parent=11 // pred_fallthru
        _
      // Predicated region
      $region17: #{link_predictor_forward.1} parent=11 // pred_check
        %p209 = pneg %p81
      $region18: #{link_predictor_forward.1} parent=11 // pred_check_branch
        %211 = sbr.rel (%p209) target = $region20
      $region19: #{link_predictor_forward.1} parent=11 // pred_region
        _
      $region20: #{link_predictor_forward.1} parent=11 // pred_fallthru
        _
      // Predicated region
      $region21: #{link_predictor_forward.1} parent=11 // pred_check
        %p212 = pneg %p102
      $region22: #{link_predictor_forward.1} parent=11 // pred_check_branch
        %214 = sbr.rel (%p212) target = $region24
      $region23: #{link_predictor_forward.1} parent=11 // pred_region
        _
      $region24: #{link_predictor_forward.1} parent=11 // pred_fallthru
        _
      // Predicated region
      $region25: #{link_predictor_forward.1} parent=11 // pred_check
        %p215 = pneg %p123
      $region26: #{link_predictor_forward.1} parent=11 // pred_check_branch
        %217 = sbr.rel (%p215) target = $region28
      $region27: #{link_predictor_forward.1} parent=11 // pred_region
        _
      $region28: #{link_predictor_forward.1} parent=11 // pred_fallthru
        _
      // Predicated region
      $region29: #{link_predictor_forward.1} parent=11 // pred_check
        %p218 = pneg %p144
      $region30: #{link_predictor_forward.1} parent=11 // pred_check_branch
        %220 = sbr.rel (%p218) target = $region32
      $region31: #{link_predictor_forward.1} parent=11 // pred_region
        _
      $region32: #{link_predictor_forward.1} parent=11 // pred_fallthru
        _
      // Predicated region
      $region33: #{link_predictor_forward.1} parent=11 // pred_check
        %p221 = pneg %p165
      $region34: #{link_predictor_forward.1} parent=11 // pred_check_branch
        %223 = sbr.rel (%p221) target = $region36
      $region35: #{link_predictor_forward.1} parent=11 // pred_region
        _
      $region36: #{link_predictor_forward.1} parent=11 // pred_fallthru
        _
    $region12: #{link_predictor_forward.1} parent=5 // pred_fallthru
      _
    %p224 = scmp.lt.s32.totalorder %s13, 2
    // Predicated region
    $region37: #{link_predictor_forward.1} parent=5 // pred_check
      %p225 = pneg %p224
    $region38: #{link_predictor_forward.1} parent=5 // pred_check_branch
      %227 = sbr.rel (%p225) target = $region40
    $region39: #{link_predictor_forward.1} parent=5 // pred_region
      // Predicated region
      $region41: #{link_predictor_forward.1} parent=39 // pred_check
        %p228 = pneg %p33
      $region42: #{link_predictor_forward.1} parent=39 // pred_check_branch
        %230 = sbr.rel (%p228) target = $region44
      $region43: #{link_predictor_forward.1} parent=39 // pred_region
        %s231 = smul.u32 16, %s13
        %s232 = ssub.s32 25, %s231
        %p233 = scmp.lt.s32.totalorder %s232, 16
        %s234 = scalar_select %p233, %s232, 16
        %s235 = smul.u32 8, %s234
        %p236 = scmp.lt.s32.totalorder %s231, 24
        %s237 = scalar_select %p236, %s231, 24
        %s238 = smul.addr %s237, 8
        %s239 = scalar_lea.vmem %s0, %s238
        %s240 = smul.u32 16, %s13
        %s241 = ssub.s32 25, %s240
        %p242 = scmp.lt.s32.totalorder %s241, 16
        %s243 = scalar_select %p242, %s241, 16
        %s244 = smul.u32 8, %s243
      $region44: #{link_predictor_forward.1} parent=39 // pred_fallthru
        _
    $region40: #{link_predictor_forward.1} parent=5 // pred_fallthru
      _
    %p245 = scmp.le.s32.totalorder 1, %s13
    %p246 = scmp.lt.s32.totalorder %s13, 3
    %p247 = pnand %p245, %p246
    %p248 = pneg %p247
    // Predicated region
    $region45: #{link_predictor_forward.1} parent=5 // pred_check
      _
    $region46: #{link_predictor_forward.1} parent=5 // pred_check_branch
      %250 = sbr.rel (%p247) target = $region48
    $region47: #{link_predictor_forward.1} parent=5 // pred_region
      %s251 = ssub.s32 %s13, 1
      %s252 = smul.u32 16, %s18
      %s253 = ssub.s32 25, %s252
      %p254 = scmp.lt.s32.totalorder %s253, 16
      %s255 = scalar_select %p254, %s253, 16
      %s256 = smul.u32 8, %s255
      %p257 = scmp.lt.s32.totalorder %s252, 24
      %s258 = scalar_select %p257, %s252, 24
      %s259 = smul.addr %s258, 8
      %s260 = scalar_lea.vmem %s0, %s259
      %p261 = pneg %p39
      %p262 = pneg %p36
      %p263 = pneg %p60
      %p264 = pneg %p57
      %p265 = pneg %p81
      %p266 = pneg %p78
      %p267 = pneg %p102
      %p268 = pneg %p99
      %p269 = pneg %p123
      %p270 = pneg %p120
      %p271 = pneg %p144
      %p272 = pneg %p141
      %p273 = pneg %p165
      %p274 = pneg %p162
      %p275 = pneg %p191
      %p276 = pneg %p188
      %p277 = scmp.lt.s32.totalorder %s18, 1
      %s278 = scalar_select %p277, %s18, 1
      %s279 = smul.addr %s278, 8
      %s280 = scalar_lea.vmem %s7, %s279
      %s281 = smul.u32 16, %s18
      %s282 = ssub.s32 25, %s281
      %p283 = scmp.lt.s32.totalorder %s282, 16
      %s284 = scalar_select %p283, %s282, 16
      %s285 = smul.u32 8, %s284
      %p286 = scmp.lt.s32.totalorder %s281, 24
      %s287 = scalar_select %p286, %s281, 24
      %s288 = smul.addr %s287, 8
      %s289 = scalar_lea.vmem %s0, %s288
      %s290 = smul.u32 16, %s18
      %s291 = ssub.s32 25, %s290
      %p292 = scmp.lt.s32.totalorder %s291, 16
      %s293 = scalar_select %p292, %s291, 16
      %s294 = smul.u32 8, %s293
      %p295 = scmp.lt.s32.totalorder %s18, 1
      %s296 = scalar_select %p295, %s18, 1
      %s297 = smul.addr %s296, 8
      %s298 = scalar_lea.vmem %s7, %s297
      %v300 = vld [vmem:[%s289] sm:$0xff]
      %v301 = vld [vmem:[%s289 + $0x8] sm:$0xff]
      %v302 = vld [vmem:[%s289 + $0x10] sm:$0xff]
      %v303 = vld [vmem:[%s289 + $0x18] sm:$0xff]
      %v304 = vld [vmem:[%s289 + $0x20] sm:$0xff]
      %v305 = vld [vmem:[%s289 + $0x28] sm:$0xff]
      %v306 = vld [vmem:[%s289 + $0x30] sm:$0xff]
      %v307 = vld [vmem:[%s289 + $0x38] sm:$0xff]
      %v308 = vld [vmem:[%s289 + $0x40] sm:$0xff]
      %v309 = vld [vmem:[%s289 + $0x48] sm:$0xff]
      %v310 = vld [vmem:[%s289 + $0x50] sm:$0xff]
      %v311 = vld [vmem:[%s289 + $0x58] sm:$0xff]
      %v312 = vld [vmem:[%s289 + $0x60] sm:$0xff]
      %v313 = vld [vmem:[%s289 + $0x68] sm:$0xff]
      %v314 = vld [vmem:[%s289 + $0x70] sm:$0xff]
      %v315 = vld [vmem:[%s289 + $0x78] sm:$0xff]
      %v316 = vpack.c.bf16 %v301, %v300
      %v317 = vpack.c.bf16 %v303, %v302
      %v318 = vpack.c.bf16 %v305, %v304
      %v319 = vpack.c.bf16 %v307, %v306
      %v320 = vpack.c.bf16 %v309, %v308
      %v321 = vpack.c.bf16 %v311, %v310
      %v322 = vpack.c.bf16 %v313, %v312
      %v323 = vpack.c.bf16 %v315, %v314
      %v324 = vld [vmem:[%s1] sm:$0xf]
      %v325 = vld [vmem:[%s1 + $0x4] sm:$0xf]
      %v326 = vld [vmem:[%s1 + $0x8] sm:$0xf]
      %v327 = vld [vmem:[%s1 + $0xc] sm:$0xf]
      %v328 = vld [vmem:[%s2] sm:$0x1]
      %v330 = vperm.slane %v328, 0
      %v336 = vunpack.c.l.b16 %v324
      %v337 = vunpack.c.l.b16 %v325
      %v338 = vunpack.c.l.b16 %v326
      %v339 = vunpack.c.l.b16 %v327
      %v340 = vpack.c.b16 %v337, %v336
      %v341 = vpack.c.b16 %v339, %v338
      %vm344 = vcmask 261120
      %v346 = vsel %vm344, %v316, 0
      %v349 = vsel %vm344, %v317, 0
      %v352 = vsel %vm344, %v318, 0
      %v355 = vsel %vm344, %v319, 0
      %v358 = vsel %vm344, %v320, 0
      %v361 = vsel %vm344, %v321, 0
      %v364 = vsel %vm344, %v322, 0
      %v367 = vsel %vm344, %v323, 0
      %369 = vmatpush.bf16.msra.mxu0 0
      %370 = vmatpush.bf16.msra.mxu0 0
      %371 = vmatpush.bf16.msra.mxu0 0
      %372 = vmatpush.bf16.msra.mxu0 0
      %373 = vmatpush.bf16.msra.mxu0 0
      %374 = vmatpush.bf16.msra.mxu0 0
      %375 = vmatpush.bf16.msra.mxu0 %v341
      %376 = vmatpush.bf16.msra.mxu0 %v340
      %377 = vmatmul.bf16.gmra.mxu0 %v346
      %v378 = vpop.f32.mrf.mxu0
      %v379 = vadd.f32 %v330, %v378
      %v380 = vpop.f32.mrf.mxu0
      %v381 = vadd.f32 %v330, %v380
      %382 = vmatmul.bf16.gmra.mxu0 %v349
      %v383 = vpop.f32.mrf.mxu0
      %v384 = vadd.f32 %v330, %v383
      %v385 = vpop.f32.mrf.mxu0
      %v386 = vadd.f32 %v330, %v385
      %387 = vmatmul.bf16.gmra.mxu0 %v352
      %v388 = vpop.f32.mrf.mxu0
      %v389 = vadd.f32 %v330, %v388
      %v390 = vpop.f32.mrf.mxu0
      %v391 = vadd.f32 %v330, %v390
      %392 = vmatmul.bf16.gmra.mxu0 %v355
      %v393 = vpop.f32.mrf.mxu0
      %v394 = vadd.f32 %v330, %v393
      %v395 = vpop.f32.mrf.mxu0
      %v396 = vadd.f32 %v330, %v395
      %397 = vmatmul.bf16.gmra.mxu0 %v358
      %v398 = vpop.f32.mrf.mxu0
      %v399 = vadd.f32 %v330, %v398
      %v400 = vpop.f32.mrf.mxu0
      %v401 = vadd.f32 %v330, %v400
      %402 = vmatmul.bf16.gmra.mxu0 %v361
      %v403 = vpop.f32.mrf.mxu0
      %v404 = vadd.f32 %v330, %v403
      %v405 = vpop.f32.mrf.mxu0
      %v406 = vadd.f32 %v330, %v405
      %407 = vmatmul.bf16.gmra.mxu0 %v364
      %v408 = vpop.f32.mrf.mxu0
      %v409 = vadd.f32 %v330, %v408
      %v410 = vpop.f32.mrf.mxu0
      %v411 = vadd.f32 %v330, %v410
      %412 = vmatmul.bf16.gmra.mxu0 %v367
      %v413 = vpop.f32.mrf.mxu0
      %v414 = vadd.f32 %v330, %v413
      %v415 = vpop.f32.mrf.mxu0
      %v416 = vadd.f32 %v330, %v415
      %417 = vdwg.mxu0
      %vm418 = vcmp.gt.f32.partialorder %v379, 0.0
      %vm419 = vcmp.gt.f32.partialorder %v381, 0.0
      %vm420 = vcmp.gt.f32.partialorder %v384, 0.0
      %vm421 = vcmp.gt.f32.partialorder %v386, 0.0
      %vm422 = vcmp.gt.f32.partialorder %v389, 0.0
      %vm423 = vcmp.gt.f32.partialorder %v391, 0.0
      %vm424 = vcmp.gt.f32.partialorder %v394, 0.0
      %vm425 = vcmp.gt.f32.partialorder %v396, 0.0
      %vm426 = vcmp.gt.f32.partialorder %v399, 0.0
      %vm427 = vcmp.gt.f32.partialorder %v401, 0.0
      %vm428 = vcmp.gt.f32.partialorder %v404, 0.0
      %vm429 = vcmp.gt.f32.partialorder %v406, 0.0
      %vm430 = vcmp.gt.f32.partialorder %v409, 0.0
      %vm431 = vcmp.gt.f32.partialorder %v411, 0.0
      %vm432 = vcmp.gt.f32.partialorder %v414, 0.0
      %vm433 = vcmp.gt.f32.partialorder %v416, 0.0
      %v434 = vsel %vm418, 2.0, 1.01
      %v435 = vsel %vm419, 2.0, 1.01
      %v436 = vsel %vm420, 2.0, 1.01
      %v437 = vsel %vm421, 2.0, 1.01
      %v438 = vsel %vm422, 2.0, 1.01
      %v439 = vsel %vm423, 2.0, 1.01
      %v440 = vsel %vm424, 2.0, 1.01
      %v441 = vsel %vm425, 2.0, 1.01
      %v442 = vsel %vm426, 2.0, 1.01
      %v443 = vsel %vm427, 2.0, 1.01
      %v444 = vsel %vm428, 2.0, 1.01
      %v445 = vsel %vm429, 2.0, 1.01
      %v446 = vsel %vm430, 2.0, 1.01
      %v447 = vsel %vm431, 2.0, 1.01
      %v448 = vsel %vm432, 2.0, 1.01
      %v449 = vsel %vm433, 2.0, 1.01
      %v450 = vmul.f32 %v379, %v434
      %v451 = vmul.f32 %v381, %v435
      %v452 = vmul.f32 %v384, %v436
      %v453 = vmul.f32 %v386, %v437
      %v454 = vmul.f32 %v389, %v438
      %v455 = vmul.f32 %v391, %v439
      %v456 = vmul.f32 %v394, %v440
      %v457 = vmul.f32 %v396, %v441
      %v458 = vmul.f32 %v399, %v442
      %v459 = vmul.f32 %v401, %v443
      %v460 = vmul.f32 %v404, %v444
      %v461 = vmul.f32 %v406, %v445
      %v462 = vmul.f32 %v409, %v446
      %v463 = vmul.f32 %v411, %v447
      %v464 = vmul.f32 %v414, %v448
      %v465 = vmul.f32 %v416, %v449
      %v466 = vpack.c.bf16 %v451, %v450
      %v467 = vpack.c.bf16 %v453, %v452
      %v468 = vpack.c.bf16 %v455, %v454
      %v469 = vpack.c.bf16 %v457, %v456
      %v470 = vpack.c.bf16 %v459, %v458
      %v471 = vpack.c.bf16 %v461, %v460
      %v472 = vpack.c.bf16 %v463, %v462
      %v473 = vpack.c.bf16 %v465, %v464
      %v474 = vld [vmem:[%s3] sm:$0xf]
      %v475 = vld [vmem:[%s3 + $0x4] sm:$0xf]
      %v476 = vld [vmem:[%s3 + $0x8] sm:$0xf]
      %v477 = vld [vmem:[%s3 + $0xc] sm:$0xf]
      %v478 = vld [vmem:[%s3 + $0x10] sm:$0xf]
      %v479 = vld [vmem:[%s3 + $0x14] sm:$0xf]
      %v480 = vld [vmem:[%s3 + $0x18] sm:$0xf]
      %v481 = vld [vmem:[%s3 + $0x1c] sm:$0xf]
      %v482 = vld [vmem:[%s3 + $0x20] sm:$0xf]
      %v483 = vld [vmem:[%s3 + $0x24] sm:$0xf]
      %v484 = vld [vmem:[%s3 + $0x28] sm:$0xf]
      %v485 = vld [vmem:[%s3 + $0x2c] sm:$0xf]
      %v486 = vld [vmem:[%s4] sm:$0x1]
      %v488 = vperm.slane %v486, 0
      %v502 = vunpack.c.l.b16 %v474
      %v503 = vunpack.c.l.b16 %v475
      %v504 = vunpack.c.l.b16 %v476
      %v505 = vunpack.c.l.b16 %v477
      %v506 = vunpack.c.l.b16 %v478
      %v507 = vunpack.c.l.b16 %v479
      %v508 = vunpack.c.l.b16 %v480
      %v509 = vunpack.c.l.b16 %v481
      %v510 = vunpack.c.l.b16 %v482
      %v511 = vunpack.c.l.b16 %v483
      %v512 = vunpack.c.l.b16 %v484
      %v513 = vunpack.c.l.b16 %v485
      %v514 = vpack.c.b16 %v503, %v502
      %v515 = vpack.c.b16 %v505, %v504
      %v516 = vpack.c.b16 %v507, %v506
      %v517 = vpack.c.b16 %v509, %v508
      %v518 = vpack.c.b16 %v511, %v510
      %v519 = vpack.c.b16 %v513, %v512
      %vm526 = vcmask 785408
      %v528 = vsel %vm526, %v466, 0
      %v531 = vsel %vm526, %v467, 0
      %v534 = vsel %vm526, %v468, 0
      %v537 = vsel %vm526, %v469, 0
      %v540 = vsel %vm526, %v470, 0
      %v543 = vsel %vm526, %v471, 0
      %v546 = vsel %vm526, %v472, 0
      %v549 = vsel %vm526, %v473, 0
      %551 = vmatpush.bf16.msra.mxu0 0
      %552 = vmatpush.bf16.msra.mxu0 0
      %553 = vmatpush.bf16.msra.mxu0 %v519
      %554 = vmatpush.bf16.msra.mxu0 %v518
      %555 = vmatpush.bf16.msra.mxu0 %v517
      %556 = vmatpush.bf16.msra.mxu0 %v516
      %557 = vmatpush.bf16.msra.mxu0 %v515
      %558 = vmatpush.bf16.msra.mxu0 %v514
      %559 = vmatmul.bf16.gmra.mxu0 %v528
      %v560 = vpop.f32.mrf.mxu0
      %v561 = vadd.f32 %v488, %v560
      %v562 = vpop.f32.mrf.mxu0
      %v563 = vadd.f32 %v488, %v562
      %564 = vmatmul.bf16.gmra.mxu0 %v531
      %v565 = vpop.f32.mrf.mxu0
      %v566 = vadd.f32 %v488, %v565
      %v567 = vpop.f32.mrf.mxu0
      %v568 = vadd.f32 %v488, %v567
      %569 = vmatmul.bf16.gmra.mxu0 %v534
      %v570 = vpop.f32.mrf.mxu0
      %v571 = vadd.f32 %v488, %v570
      %v572 = vpop.f32.mrf.mxu0
      %v573 = vadd.f32 %v488, %v572
      %574 = vmatmul.bf16.gmra.mxu0 %v537
      %v575 = vpop.f32.mrf.mxu0
      %v576 = vadd.f32 %v488, %v575
      %v577 = vpop.f32.mrf.mxu0
      %v578 = vadd.f32 %v488, %v577
      %579 = vmatmul.bf16.gmra.mxu0 %v540
      %v580 = vpop.f32.mrf.mxu0
      %v581 = vadd.f32 %v488, %v580
      %v582 = vpop.f32.mrf.mxu0
      %v583 = vadd.f32 %v488, %v582
      %584 = vmatmul.bf16.gmra.mxu0 %v543
      %v585 = vpop.f32.mrf.mxu0
      %v586 = vadd.f32 %v488, %v585
      %v587 = vpop.f32.mrf.mxu0
      %v588 = vadd.f32 %v488, %v587
      %589 = vmatmul.bf16.gmra.mxu0 %v546
      %v590 = vpop.f32.mrf.mxu0
      %v591 = vadd.f32 %v488, %v590
      %v592 = vpop.f32.mrf.mxu0
      %v593 = vadd.f32 %v488, %v592
      %594 = vmatmul.bf16.gmra.mxu0 %v549
      %v595 = vpop.f32.mrf.mxu0
      %v596 = vadd.f32 %v488, %v595
      %v597 = vpop.f32.mrf.mxu0
      %v598 = vadd.f32 %v488, %v597
      %599 = vdwg.mxu0
      %vm600 = vcmp.gt.f32.partialorder %v561, 0.0
      %vm601 = vcmp.gt.f32.partialorder %v563, 0.0
      %vm602 = vcmp.gt.f32.partialorder %v566, 0.0
      %vm603 = vcmp.gt.f32.partialorder %v568, 0.0
      %vm604 = vcmp.gt.f32.partialorder %v571, 0.0
      %vm605 = vcmp.gt.f32.partialorder %v573, 0.0
      %vm606 = vcmp.gt.f32.partialorder %v576, 0.0
      %vm607 = vcmp.gt.f32.partialorder %v578, 0.0
      %vm608 = vcmp.gt.f32.partialorder %v581, 0.0
      %vm609 = vcmp.gt.f32.partialorder %v583, 0.0
      %vm610 = vcmp.gt.f32.partialorder %v586, 0.0
      %vm611 = vcmp.gt.f32.partialorder %v588, 0.0
      %vm612 = vcmp.gt.f32.partialorder %v591, 0.0
      %vm613 = vcmp.gt.f32.partialorder %v593, 0.0
      %vm614 = vcmp.gt.f32.partialorder %v596, 0.0
      %vm615 = vcmp.gt.f32.partialorder %v598, 0.0
      %v616 = vsel %vm600, 2.0, 1.01
      %v617 = vsel %vm601, 2.0, 1.01
      %v618 = vsel %vm602, 2.0, 1.01
      %v619 = vsel %vm603, 2.0, 1.01
      %v620 = vsel %vm604, 2.0, 1.01
      %v621 = vsel %vm605, 2.0, 1.01
      %v622 = vsel %vm606, 2.0, 1.01
      %v623 = vsel %vm607, 2.0, 1.01
      %v624 = vsel %vm608, 2.0, 1.01
      %v625 = vsel %vm609, 2.0, 1.01
      %v626 = vsel %vm610, 2.0, 1.01
      %v627 = vsel %vm611, 2.0, 1.01
      %v628 = vsel %vm612, 2.0, 1.01
      %v629 = vsel %vm613, 2.0, 1.01
      %v630 = vsel %vm614, 2.0, 1.01
      %v631 = vsel %vm615, 2.0, 1.01
      %v632 = vmul.f32 %v561, %v616
      %v633 = vmul.f32 %v563, %v617
      %v634 = vmul.f32 %v566, %v618
      %v635 = vmul.f32 %v568, %v619
      %v636 = vmul.f32 %v571, %v620
      %v637 = vmul.f32 %v573, %v621
      %v638 = vmul.f32 %v576, %v622
      %v639 = vmul.f32 %v578, %v623
      %v640 = vmul.f32 %v581, %v624
      %v641 = vmul.f32 %v583, %v625
      %v642 = vmul.f32 %v586, %v626
      %v643 = vmul.f32 %v588, %v627
      %v644 = vmul.f32 %v591, %v628
      %v645 = vmul.f32 %v593, %v629
      %v646 = vmul.f32 %v596, %v630
      %v647 = vmul.f32 %v598, %v631
      %v648 = vld [vmem:[%s5] sm:$0xf]
      %v649 = vpack.c.bf16 %v633, %v632
      %v650 = vpack.c.bf16 %v635, %v634
      %v651 = vpack.c.bf16 %v637, %v636
      %v652 = vpack.c.bf16 %v639, %v638
      %v653 = vpack.c.bf16 %v641, %v640
      %v654 = vpack.c.bf16 %v643, %v642
      %v655 = vpack.c.bf16 %v645, %v644
      %v656 = vpack.c.bf16 %v647, %v646
      %v657 = vld [vmem:[%s6] sm:$0xff]
      %659 = vset.pattern.permute.xlu0 0
      %660 = vperm.xlu0 %659, %v657
      %v661 = vpop.permute.xlu0 %660
      %v664 = vsel %vm526, %v648, 0
      %v667 = vsel %vm526, %v649, 0
      %v670 = vsel %vm526, %v650, 0
      %v673 = vsel %vm526, %v651, 0
      %v676 = vsel %vm526, %v652, 0
      %v679 = vsel %vm526, %v653, 0
      %v682 = vsel %vm526, %v654, 0
      %v685 = vsel %vm526, %v655, 0
      %v688 = vsel %vm526, %v656, 0
      %690 = vmatpush.bf16.xpose.msra.mxu0 %v688
      %691 = vmatpush.bf16.xpose.msra.mxu0 %v685
      %692 = vmatpush.bf16.xpose.msra.mxu0 %v682
      %693 = vmatpush.bf16.xpose.msra.mxu0 %v679
      %694 = vmatpush.bf16.xpose.msra.mxu0 %v676
      %695 = vmatpush.bf16.xpose.msra.mxu0 %v673
      %696 = vmatpush.bf16.xpose.msra.mxu0 %v670
      %697 = vmatpush.bf16.xpose.msra.mxu0 %v667
      %698 = vmatmul.bf16.gmra.mxu0 %v664
      %v699 = vpop.f32.mrf.mxu0
      %v700 = vadd.f32 %v661, %v699
      %v701 = vpop.f32.mrf.mxu0
      %702 = vdwg.mxu0
      %703 = vst [vmem:[%s298] sm:$0xff] %v700
      %p704 = scmp.lt.s32.totalorder %s18, 1
      %s705 = scalar_select %p704, %s18, 1
      %s706 = smul.addr %s705, 8
      %s707 = scalar_lea.vmem %s7, %s706
      // Predicated region
      $region49: #{link_predictor_forward.1} parent=47 // pred_check
        %p708 = pneg %p188
      $region50: #{link_predictor_forward.1} parent=47 // pred_check_branch
        %710 = sbr.rel (%p708) target = $region52
      $region51: #{link_predictor_forward.1} parent=47 // pred_region
        _
      $region52: #{link_predictor_forward.1} parent=47 // pred_fallthru
        _
    $region48: #{link_predictor_forward.1} parent=5 // pred_fallthru
      _
    %p711 = scmp.le.s32.totalorder 2, %s13
    // Predicated region
    $region53: #{link_predictor_forward.1} parent=5 // pred_check
      %p712 = pneg %p711
    $region54: #{link_predictor_forward.1} parent=5 // pred_check_branch
      %714 = sbr.rel (%p712) target = $region56
    $region55: #{link_predictor_forward.1} parent=5 // pred_region
      %s715 = ssub.s32 %s13, 2
      // Predicated region
      $region57: #{link_predictor_forward.1} parent=55 // pred_check
        %p716 = pneg %p194
      $region58: #{link_predictor_forward.1} parent=55 // pred_check_branch
        %718 = sbr.rel (%p716) target = $region60
      $region59: #{link_predictor_forward.1} parent=55 // pred_region
        %p719 = scmp.lt.s32.totalorder %s19, 1
        %s720 = scalar_select %p719, %s19, 1
        %s721 = smul.addr %s720, 8
        %s722 = scalar_lea.vmem %s7, %s721
      $region60: #{link_predictor_forward.1} parent=55 // pred_fallthru
        _
    $region56: #{link_predictor_forward.1} parent=5 // pred_fallthru
      _
  $region6: #{link_predictor_forward.1} parent=0 // loop_footer
    %s17 = sadd.s32 1, %s13
  $region7: #{link_predictor_forward.1} parent=0 // loop_footer_branch
    %12 = sbr.rel target = $region3
  $region8: #{link_predictor_forward.1} parent=0 // loop_exit
    _

</llo_original>
